<compile_context>
chip_gen: v6e
topology: v6e:2x2x1
jax: 0.10.0
libtpu: 0.0.40
codegen_flags: <defaults>
</compile_context>

<pallas_src>
import jax
import jax.numpy as jnp
from jax.experimental import pallas as pl
from jax.experimental.pallas import tpu as pltpu


def _yolo_kernel(x_ref, sign_ref, mult_ref, add_ref, o_ref):
    """One batch tile.

    x_ref:    VMEM (1, C, S) raw conv outputs (C = nA*(5+num_classes), S = nG*nG).
    sign_ref: VMEM (C, 1)  -1.0 for sigmoid rows, +1.0 for exp rows (w, h).
    mult_ref: VMEM (C, 1)  per-channel multiplicative scale (stride / anchor).
    add_ref:  VMEM (C, S)  per-channel additive term (grid_x/grid_y * stride).
    o_ref:    VMEM (1, C, S) decoded outputs (channel-major).
    """
    pred = x_ref[0].astype(jnp.float32)          # (C, S)
    sign = sign_ref[...]                         # (C, 1), lane-broadcast
    e = jnp.exp(pred * sign)                     # single EUP pass over the tile
    act = jnp.where(sign > 0.0, e, 1.0 / (1.0 + e))
    o_ref[0] = act * mult_ref[...] + add_ref[...]


def yolo_layer_forward(x, anchors, num_classes, img_dim):
    """Pallas implementation of YOLOLayer.forward(x, targets=None).

    x: (nB, nA*(5+num_classes), nG, nG) conv output (NCHW).
    anchors: (nA, 2) anchor (w, h) in image pixels.
    Returns: (nB, nA*nG*nG, 5+num_classes) float32.
    """
    nB, C, nG, nG2 = x.shape
    assert nG == nG2
    nA = anchors.shape[0]
    bbox_attrs = 5 + num_classes
    assert C == nA * bbox_attrs
    stride = float(img_dim) / float(nG)
    S = nG * nG

    # ---- per-channel constants (channel c = a * bbox_attrs + attr) ----------
    attr_idx = jnp.arange(C, dtype=jnp.int32) % bbox_attrs
    anch_idx = jnp.arange(C, dtype=jnp.int32) // bbox_attrs
    anchors_f = anchors.astype(jnp.float32)
    aw = anchors_f[anch_idx, 0]                  # anchor width in pixels
    ah = anchors_f[anch_idx, 1]                  # anchor height in pixels

    is_exp = (attr_idx == 2) | (attr_idx == 3)
    sign = jnp.where(is_exp, 1.0, -1.0).astype(jnp.float32).reshape(C, 1)

    # output = act * mult + add, with the torch `* stride` folded in:
    #   attr 0/1: sigmoid(x)*stride + grid*stride
    #   attr 2/3: exp(w)*(a/stride)*stride = exp(w)*a
    #   attr 4+ : sigmoid(x)
    mult = jnp.where(attr_idx < 2, jnp.float32(stride),
           jnp.where(attr_idx == 2, aw,
           jnp.where(attr_idx == 3, ah, 1.0))).astype(jnp.float32).reshape(C, 1)

    sidx = jnp.arange(S, dtype=jnp.int32)        # s = gy*nG + gx (row-major)
    gx = (sidx % nG).astype(jnp.float32) * stride
    gy = (sidx // nG).astype(jnp.float32) * stride
    add = jnp.zeros((C, S), jnp.float32)
    add = jnp.where((attr_idx == 0)[:, None], gx[None, :], add)
    add = jnp.where((attr_idx == 1)[:, None], gy[None, :], add)

    # ---- kernel call ---------------------------------------------------------
    xr = x.reshape(nB, C, S)                     # pure flatten of (nG, nG)

    out = pl.pallas_call(
        _yolo_kernel,
        out_shape=jax.ShapeDtypeStruct((nB, C, S), jnp.float32),
        grid_spec=pl.GridSpec(
            grid=(nB,),
            in_specs=[
                pl.BlockSpec((1, C, S), lambda b: (b, 0, 0)),   # x tile
                pl.BlockSpec((C, 1), lambda b: (0, 0)),          # sign (resident)
                pl.BlockSpec((C, 1), lambda b: (0, 0)),          # mult (resident)
                pl.BlockSpec((C, S), lambda b: (0, 0)),          # add  (resident)
            ],
            out_specs=pl.BlockSpec((1, C, S), lambda b: (b, 0, 0)),
        ),
        compiler_params=pltpu.CompilerParams(
            dimension_semantics=("parallel",)),
    )(xr, sign, mult, add)

    # Layout glue matching torch.cat(..., -1); kept outside the hot kernel:
    # (nB, C, S) -> (nB, nA, attrs, S) -> (nB, nA, S, attrs) -> (nB, nA*S, attrs)
    return (out.reshape(nB, nA, bbox_attrs, S)
               .transpose(0, 1, 3, 2)
               .reshape(nB, nA * S, bbox_attrs))


def yolo_layer_ref(x, anchors, num_classes, img_dim):
    """Pure-JAX reference mirroring the PyTorch forward (targets=None)."""
    nB, _, nG, _ = x.shape
    nA = anchors.shape[0]
    A5 = 5 + num_classes
    stride = float(img_dim) / float(nG)
    pred = x.reshape(nB, nA, A5, nG, nG).transpose(0, 1, 3, 4, 2)    # (nB,nA,nG,nG,A5)
    sx = jax.nn.sigmoid(pred[..., 0])
    sy = jax.nn.sigmoid(pred[..., 1])
    w = pred[..., 2]
    h = pred[..., 3]
    conf = jax.nn.sigmoid(pred[..., 4])
    cls = jax.nn.sigmoid(pred[..., 5:])
    gx = jnp.arange(nG, dtype=jnp.float32).reshape(1, 1, 1, nG)
    gy = jnp.arange(nG, dtype=jnp.float32).reshape(1, 1, nG, 1)
    sa = anchors.astype(jnp.float32) / stride
    aw = sa[:, 0].reshape(1, nA, 1, 1)
    ah = sa[:, 1].reshape(1, nA, 1, 1)
    boxes = jnp.stack([sx + gx, sy + gy, jnp.exp(w) * aw, jnp.exp(h) * ah], axis=-1)
    return jnp.concatenate(
        [boxes.reshape(nB, -1, 4) * stride,
         conf.reshape(nB, -1, 1),
         cls.reshape(nB, -1, num_classes)], axis=-1)


if __name__ == "__main__":
    num_classes = 4
    img_dim = 64
    nG = 16
    anchors = jnp.array([[10.0, 13.0], [16.0, 30.0], [33.0, 23.0]], dtype=jnp.float32)
    nA = anchors.shape[0]
    bbox_attrs = 5 + num_classes

    key = jax.random.PRNGKey(0)
    x = 0.5 * jax.random.normal(key, (2, nA * bbox_attrs, nG, nG), dtype=jnp.float32)

    out = jax.block_until_ready(yolo_layer_forward(x, anchors, num_classes, img_dim))
    ref = yolo_layer_ref(x, anchors, num_classes, img_dim)

    assert out.shape == (2, nA * nG * nG, bbox_attrs), out.shape
    assert jnp.allclose(out, ref, atol=1e-5, rtol=1e-5), float(jnp.max(jnp.abs(out - ref)))

    print("KERNEL_OK")
</pallas_src>

<mosaic_0001>
module attributes {stable_mosaic.version = 11 : i64} {
  func.func @_yolo_kernel(%arg0: i32, %arg1: memref<1x27x256xf32, #tpu.memory_space<vmem>>, %arg2: memref<27x1xf32, #tpu.memory_space<vmem>>, %arg3: memref<27x1xf32, #tpu.memory_space<vmem>>, %arg4: memref<27x256xf32, #tpu.memory_space<vmem>>, %arg5: memref<1x27x256xf32, #tpu.memory_space<vmem>>) attributes {dimension_semantics = [#tpu.dimension_semantics<parallel>], iteration_bounds = array<i64: 2>, scalar_prefetch = 0 : i64, scratch_operands = 0 : i64, tpu.core_type = #tpu.core_type<tc>, window_params = [{transform_indices = @transform_0, window_bounds = array<i64: 1, 27, 256>}, {pipeline_mode = #tpu.pipeline_mode<synchronous>, transform_indices = @transform_1, window_bounds = array<i64: 27, 1>}, {pipeline_mode = #tpu.pipeline_mode<synchronous>, transform_indices = @transform_2, window_bounds = array<i64: 27, 1>}, {pipeline_mode = #tpu.pipeline_mode<synchronous>, transform_indices = @transform_3, window_bounds = array<i64: 27, 256>}, {transform_indices = @transform_4, window_bounds = array<i64: 1, 27, 256>}]} {
    %c0 = arith.constant 0 : index
    %c0_0 = arith.constant 0 : index
    %c0_1 = arith.constant 0 : index
    %0 = vector.load %arg1[%c0, %c0_0, %c0_1] : memref<1x27x256xf32, #tpu.memory_space<vmem>>, vector<1x27x256xf32>
    %1 = vector.shape_cast %0 : vector<1x27x256xf32> to vector<27x256xf32>
    %c0_2 = arith.constant 0 : index
    %c0_3 = arith.constant 0 : index
    %2 = vector.load %arg2[%c0_2, %c0_3] : memref<27x1xf32, #tpu.memory_space<vmem>>, vector<27x1xf32>
    %3 = vector.broadcast %2 : vector<27x1xf32> to vector<27x256xf32>
    %4 = arith.mulf %1, %3 : vector<27x256xf32>
    %5 = math.exp %4 : vector<27x256xf32>
    %cst = arith.constant 0.000000e+00 : f32
    %6 = vector.broadcast %cst : f32 to vector<27x1xf32>
    %7 = arith.cmpf ogt, %2, %6 : vector<27x1xf32>
    %cst_4 = arith.constant 1.000000e+00 : f32
    %8 = vector.broadcast %cst_4 : f32 to vector<27x256xf32>
    %9 = arith.addf %8, %5 : vector<27x256xf32>
    %cst_5 = arith.constant 1.000000e+00 : f32
    %10 = vector.broadcast %cst_5 : f32 to vector<27x256xf32>
    %11 = arith.divf %10, %9 : vector<27x256xf32>
    %12 = vector.shape_cast %7 : vector<27x1xi1> to vector<27x1xi1>
    %13 = vector.broadcast %12 : vector<27x1xi1> to vector<27x256xi1>
    %14 = arith.select %13, %5, %11 : vector<27x256xi1>, vector<27x256xf32>
    %c0_6 = arith.constant 0 : index
    %c0_7 = arith.constant 0 : index
    %15 = vector.load %arg3[%c0_6, %c0_7] : memref<27x1xf32, #tpu.memory_space<vmem>>, vector<27x1xf32>
    %16 = vector.broadcast %15 : vector<27x1xf32> to vector<27x256xf32>
    %17 = arith.mulf %14, %16 : vector<27x256xf32>
    %c0_8 = arith.constant 0 : index
    %c0_9 = arith.constant 0 : index
    %18 = vector.load %arg4[%c0_8, %c0_9] : memref<27x256xf32, #tpu.memory_space<vmem>>, vector<27x256xf32>
    %19 = arith.addf %17, %18 : vector<27x256xf32>
    %c0_10 = arith.constant 0 : index
    %c0_11 = arith.constant 0 : index
    %c0_12 = arith.constant 0 : index
    %20 = vector.load %arg5[%c0_10, %c0_11, %c0_12] : memref<1x27x256xf32, #tpu.memory_space<vmem>>, vector<1x27x256xf32>
    %21 = vector.shape_cast %20 : vector<1x27x256xf32> to vector<27x256xf32>
    %22 = vector.shape_cast %19 : vector<27x256xf32> to vector<1x27x256xf32>
    tpu.vector_store %arg5[%c0_10, %c0_11, %c0_12], %22 {strides = array<i32>} : memref<1x27x256xf32, #tpu.memory_space<vmem>>, vector<1x27x256xf32>,
    return
  }
  func.func @transform_0(%arg0: i32) -> (i32, i32, i32) {
    %c0_i32 = arith.constant 0 : i32
    %c0_i32_0 = arith.constant 0 : i32
    %c0_i32_1 = arith.constant 0 : i32
    return %arg0, %c0_i32, %c0_i32_0 : i32, i32, i32
  }
  func.func @transform_1(%arg0: i32) -> (i32, i32) {
    %c0_i32 = arith.constant 0 : i32
    %c0_i32_0 = arith.constant 0 : i32
    %c0_i32_1 = arith.constant 0 : i32
    return %c0_i32, %c0_i32_0 : i32, i32
  }
  func.func @transform_2(%arg0: i32) -> (i32, i32) {
    %c0_i32 = arith.constant 0 : i32
    %c0_i32_0 = arith.constant 0 : i32
    %c0_i32_1 = arith.constant 0 : i32
    return %c0_i32, %c0_i32_0 : i32, i32
  }
  func.func @transform_3(%arg0: i32) -> (i32, i32) {
    %c0_i32 = arith.constant 0 : i32
    %c0_i32_0 = arith.constant 0 : i32
    %c0_i32_1 = arith.constant 0 : i32
    return %c0_i32, %c0_i32_0 : i32, i32
  }
  func.func @transform_4(%arg0: i32) -> (i32, i32, i32) {
    %c0_i32 = arith.constant 0 : i32
    %c0_i32_0 = arith.constant 0 : i32
    %c0_i32_1 = arith.constant 0 : i32
    return %arg0, %c0_i32, %c0_i32_0 : i32, i32, i32
  }
}

</mosaic_0001>

<llo_original>
// kernel: tpu_custom_call.1
$region0: #{tpu_custom_call.1}
  #allocation0 [shape = 'u32[]', space=smem, size = 0x4, offset = 0x4, fixed_abs, tag = 'smem constant byte address 0x4 - core index']
  #allocation1 [shape = 'u32[144,128]{1,0:T(1,128)}', space=vmem, size = 0x12000, scoped, tag = 'internal scratch']
  %s0 = inlined_call_operand.vmem [shape: f32[2,27,256], index: 0, kind: input, shape index: {}]
  %s1 = inlined_call_operand.vmem [shape: f32[27,1], index: 1, kind: input, shape index: {}]
  %s2 = inlined_call_operand.vmem [shape: f32[27,1], index: 2, kind: input, shape index: {}]
  %s3 = inlined_call_operand.vmem [shape: f32[27,256], index: 3, kind: input, shape index: {}]
  %s4 = inlined_call_operand.vmem [shape: f32[2,27,256], index: 4, kind: output, shape index: {}]
  %s5 = sld [smem:[#allocation0]]
  $region49: #{tpu_custom_call.1} parent=0
    _
  %s7 = ssub.s32 1, %s5
  %s8 = scalar_select 0, %s7, %s5
  loop: start=0, step=1, limit=4
  $region2: #{tpu_custom_call.1} parent=0 // loop_pre_header
    _
  $region3: #{tpu_custom_call.1} parent=0 // loop_header
    %s10 = sphi 0, %s14
    %p11 = scmp.ge.s32.totalorder %s10, 4
    %s20 = sphi 0, %s22
    %s23 = sphi 0, %s20
    %s24 = sphi 0, %s23
    %s40 = sphi 0, %s24
    %s44 = sphi 0, %s44
    %s46 = sphi 0, %s44
    %s47 = sphi 0, %s46
    %s61 = sphi 0, %s47
    %s65 = sphi 0, %s65
    %s67 = sphi 0, %s65
    %s68 = sphi 0, %s67
    %s82 = sphi 0, %s68
    %s86 = sphi 0, %s86
    %s88 = sphi 0, %s86
    %s89 = sphi 0, %s88
    %s103 = sphi 0, %s89
    %s109 = sphi 0, %s111
    %s112 = sphi 0, %s109
    %s113 = sphi 0, %s112
    %s129 = sphi 0, %s113
  $region4: #{tpu_custom_call.1} parent=0 // loop_header_branch
    %13 = sbr.rel (%p11) target = $region8
  $region5: #{tpu_custom_call.1} parent=0 // loop_body
    %s15 = ssub.s32 %s10, 1
    %s16 = ssub.s32 %s10, 2
    %s17 = sadd.s32 %s10, 1
    %s18 = ssub.s32 %s10, %s17
    %p19 = scmp.eq.s32.totalorder %s18, 0
    %s21 = sadd.s32 %s20, 1
    %s22 = scalar_select %p19, %s20, %s21
    %p25 = pneg %p19
    %p26 = scmp.eq.s32.totalorder %s10, 1
    %p27 = por %p25, %p26
    %p28 = scmp.ne.s32.totalorder %s20, %s23
    %p29 = scmp.eq.s32.totalorder %s10, 0
    %p30 = por %p28, %p29
    %p31 = scmp.ne.s32.totalorder %s20, %s23
    %p32 = scmp.eq.s32.totalorder %s15, 1
    %p33 = por %p31, %p32
    %p34 = scmp.ne.s32.totalorder %s23, %s24
    %p35 = scmp.eq.s32.totalorder %s15, 0
    %p36 = por %p34, %p35
    %p37 = scmp.ne.s32.totalorder %s23, %s24
    %p38 = scmp.eq.s32.totalorder %s16, 1
    %p39 = por %p37, %p38
    %p41 = scmp.ne.s32.totalorder %s24, %s40
    %p42 = scmp.eq.s32.totalorder %s16, 0
    %p43 = por %p41, %p42
    %s45 = sadd.s32 %s44, 1
    %p48 = scmp.eq.s32.totalorder %s10, 1
    %p49 = scmp.ne.s32.totalorder %s44, %s46
    %p50 = scmp.eq.s32.totalorder %s10, 0
    %p51 = por %p49, %p50
    %p52 = scmp.ne.s32.totalorder %s44, %s46
    %p53 = scmp.eq.s32.totalorder %s15, 1
    %p54 = por %p52, %p53
    %p55 = scmp.ne.s32.totalorder %s46, %s47
    %p56 = scmp.eq.s32.totalorder %s15, 0
    %p57 = por %p55, %p56
    %p58 = scmp.ne.s32.totalorder %s46, %s47
    %p59 = scmp.eq.s32.totalorder %s16, 1
    %p60 = por %p58, %p59
    %p62 = scmp.ne.s32.totalorder %s47, %s61
    %p63 = scmp.eq.s32.totalorder %s16, 0
    %p64 = por %p62, %p63
    %s66 = sadd.s32 %s65, 1
    %p69 = scmp.eq.s32.totalorder %s10, 1
    %p70 = scmp.ne.s32.totalorder %s65, %s67
    %p71 = scmp.eq.s32.totalorder %s10, 0
    %p72 = por %p70, %p71
    %p73 = scmp.ne.s32.totalorder %s65, %s67
    %p74 = scmp.eq.s32.totalorder %s15, 1
    %p75 = por %p73, %p74
    %p76 = scmp.ne.s32.totalorder %s67, %s68
    %p77 = scmp.eq.s32.totalorder %s15, 0
    %p78 = por %p76, %p77
    %p79 = scmp.ne.s32.totalorder %s67, %s68
    %p80 = scmp.eq.s32.totalorder %s16, 1
    %p81 = por %p79, %p80
    %p83 = scmp.ne.s32.totalorder %s68, %s82
    %p84 = scmp.eq.s32.totalorder %s16, 0
    %p85 = por %p83, %p84
    %s87 = sadd.s32 %s86, 1
    %p90 = scmp.eq.s32.totalorder %s10, 1
    %p91 = scmp.ne.s32.totalorder %s86, %s88
    %p92 = scmp.eq.s32.totalorder %s10, 0
    %p93 = por %p91, %p92
    %p94 = scmp.ne.s32.totalorder %s86, %s88
    %p95 = scmp.eq.s32.totalorder %s15, 1
    %p96 = por %p94, %p95
    %p97 = scmp.ne.s32.totalorder %s88, %s89
    %p98 = scmp.eq.s32.totalorder %s15, 0
    %p99 = por %p97, %p98
    %p100 = scmp.ne.s32.totalorder %s88, %s89
    %p101 = scmp.eq.s32.totalorder %s16, 1
    %p102 = por %p100, %p101
    %p104 = scmp.ne.s32.totalorder %s89, %s103
    %p105 = scmp.eq.s32.totalorder %s16, 0
    %p106 = por %p104, %p105
    %s107 = ssub.s32 %s10, %s17
    %p108 = scmp.eq.s32.totalorder %s107, 0
    %s110 = sadd.s32 %s109, 1
    %s111 = scalar_select %p108, %s109, %s110
    %p114 = pneg %p108
    %p115 = scmp.eq.s32.totalorder %s10, 1
    %p116 = por %p114, %p115
    %p117 = scmp.ne.s32.totalorder %s109, %s112
    %p118 = scmp.eq.s32.totalorder %s10, 0
    %p119 = por %p117, %p118
    %p120 = scmp.ne.s32.totalorder %s109, %s112
    %p121 = scmp.eq.s32.totalorder %s15, 1
    %p122 = por %p120, %p121
    %p123 = scmp.ne.s32.totalorder %s112, %s113
    %p124 = scmp.eq.s32.totalorder %s15, 0
    %p125 = por %p123, %p124
    %p126 = scmp.ne.s32.totalorder %s112, %s113
    %p127 = scmp.eq.s32.totalorder %s16, 1
    %p128 = por %p126, %p127
    %p130 = scmp.ne.s32.totalorder %s113, %s129
    %p131 = scmp.eq.s32.totalorder %s16, 0
    %p132 = por %p130, %p131
    %p133 = scmp.le.s32.totalorder 1, %s10
    %p134 = scmp.lt.s32.totalorder %s10, 3
    %p135 = pnand %p133, %p134
    %p136 = pneg %p135
    // Predicated region
    $region9: #{tpu_custom_call.1} parent=5 // pred_check
      _
    $region10: #{tpu_custom_call.1} parent=5 // pred_check_branch
      %138 = sbr.rel (%p135) target = $region12
    $region11: #{tpu_custom_call.1} parent=5 // pred_region
      %s139 = ssub.s32 %s10, 1
      // Predicated region
      $region13: #{tpu_custom_call.1} parent=11 // pred_check
        %p140 = pneg %p57
      $region14: #{tpu_custom_call.1} parent=11 // pred_check_branch
        %142 = sbr.rel (%p140) target = $region16
      $region15: #{tpu_custom_call.1} parent=11 // pred_region
        _
      $region16: #{tpu_custom_call.1} parent=11 // pred_fallthru
        _
      // Predicated region
      $region17: #{tpu_custom_call.1} parent=11 // pred_check
        %p143 = pneg %p78
      $region18: #{tpu_custom_call.1} parent=11 // pred_check_branch
        %145 = sbr.rel (%p143) target = $region20
      $region19: #{tpu_custom_call.1} parent=11 // pred_region
        _
      $region20: #{tpu_custom_call.1} parent=11 // pred_fallthru
        _
      // Predicated region
      $region21: #{tpu_custom_call.1} parent=11 // pred_check
        %p146 = pneg %p99
      $region22: #{tpu_custom_call.1} parent=11 // pred_check_branch
        %148 = sbr.rel (%p146) target = $region24
      $region23: #{tpu_custom_call.1} parent=11 // pred_region
        _
      $region24: #{tpu_custom_call.1} parent=11 // pred_fallthru
        _
    $region12: #{tpu_custom_call.1} parent=5 // pred_fallthru
      _
    %p149 = scmp.lt.s32.totalorder %s10, 2
    // Predicated region
    $region25: #{tpu_custom_call.1} parent=5 // pred_check
      %p150 = pneg %p149
    $region26: #{tpu_custom_call.1} parent=5 // pred_check_branch
      %152 = sbr.rel (%p150) target = $region28
    $region27: #{tpu_custom_call.1} parent=5 // pred_region
      // Predicated region
      $region29: #{tpu_custom_call.1} parent=27 // pred_check
        %p153 = pneg %p30
      $region30: #{tpu_custom_call.1} parent=27 // pred_check_branch
        %155 = sbr.rel (%p153) target = $region32
      $region31: #{tpu_custom_call.1} parent=27 // pred_region
        %p156 = scmp.lt.s32.totalorder %s10, 1
        %s157 = scalar_select %p156, %s10, 1
        %s158 = smul.addr %s157, 8
        %s159 = smul.addr %s158, 8
        %s160 = scalar_lea.vmem %s0, %s159
      $region32: #{tpu_custom_call.1} parent=27 // pred_fallthru
        _
    $region28: #{tpu_custom_call.1} parent=5 // pred_fallthru
      _
    %p161 = scmp.le.s32.totalorder 1, %s10
    %p162 = scmp.lt.s32.totalorder %s10, 3
    %p163 = pnand %p161, %p162
    %p164 = pneg %p163
    // Predicated region
    $region33: #{tpu_custom_call.1} parent=5 // pred_check
      _
    $region34: #{tpu_custom_call.1} parent=5 // pred_check_branch
      %166 = sbr.rel (%p163) target = $region36
    $region35: #{tpu_custom_call.1} parent=5 // pred_region
      %s167 = ssub.s32 %s10, 1
      %p168 = scmp.lt.s32.totalorder %s15, 1
      %s169 = scalar_select %p168, %s15, 1
      %s170 = smul.addr %s169, 8
      %s171 = smul.addr %s170, 8
      %s172 = scalar_lea.vmem %s0, %s171
      %p173 = pneg %p36
      %p174 = pneg %p33
      %p175 = pneg %p57
      %p176 = pneg %p54
      %p177 = pneg %p78
      %p178 = pneg %p75
      %p179 = pneg %p99
      %p180 = pneg %p96
      %p181 = pneg %p125
      %p182 = pneg %p122
      %p183 = scmp.lt.s32.totalorder %s15, 1
      %s184 = scalar_select %p183, %s15, 1
      %s185 = smul.addr %s184, 8
      %s186 = smul.addr %s185, 8
      %s187 = scalar_lea.vmem %s4, %s186
      %p188 = scmp.lt.s32.totalorder %s15, 1
      %s189 = scalar_select %p188, %s15, 1
      %s190 = smul.addr %s189, 8
      %s191 = smul.addr %s190, 8
      %s192 = scalar_lea.vmem %s0, %s191
      %p193 = scmp.lt.s32.totalorder %s15, 1
      %s194 = scalar_select %p193, %s15, 1
      %s195 = smul.addr %s194, 8
      %s196 = smul.addr %s195, 8
      %s197 = scalar_lea.vmem %s4, %s196
      %v198 = vld [vmem:[%s192] sm:$0xff]
      %v199 = vld [vmem:[%s192 + $0x8] sm:$0xff]
      %v200 = vld [vmem:[%s192 + $0x10] sm:$0xff]
      %v201 = vld [vmem:[%s192 + $0x18] sm:$0xff]
      %v202 = vld [vmem:[%s192 + $0x20] sm:$0xff]
      %v203 = vld [vmem:[%s192 + $0x28] sm:$0xff]
      %v204 = vld [vmem:[%s192 + $0x30] sm:$0x7]
      %v205 = vld [vmem:[%s192 + $0x38] sm:$0x7]
      %v206 = vld [vmem:[%s1] sm:$0xff]
      %v207 = vld [vmem:[%s1 + $0x8] sm:$0xff]
      %v208 = vld [vmem:[%s1 + $0x10] sm:$0xff]
      %v209 = vld [vmem:[%s1 + $0x18] sm:$0x7]
      %211 = vset.pattern.permute.xlu0 0
      %212 = vperm.xlu0 %211, %v206
      %v213 = vpop.permute.xlu0 %212
      %216 = vset.pattern.permute.xlu0 0
      %217 = vperm.xlu0 %216, %v207
      %v218 = vpop.permute.xlu0 %217
      %221 = vset.pattern.permute.xlu0 0
      %222 = vperm.xlu0 %221, %v208
      %v223 = vpop.permute.xlu0 %222
      %226 = vset.pattern.permute.xlu0 0
      %227 = vperm.xlu0 %226, %v209
      %v228 = vpop.permute.xlu0 %227
      %v230 = vmul.f32 %v198, %v213
      %v231 = vmul.f32 %v199, %v213
      %v232 = vmul.f32 %v200, %v218
      %v233 = vmul.f32 %v201, %v218
      %v234 = vmul.f32 %v202, %v223
      %v235 = vmul.f32 %v203, %v223
      %v236 = vmul.f32 %v204, %v228
      %v237 = vmul.f32 %v205, %v228
      %v238 = vmul.f32 %v230, 1.442695
      %v239 = vpow.pop %v238
      %v240 = vmul.f32 %v231, 1.442695
      %v241 = vpow.pop %v240
      %v242 = vmul.f32 %v232, 1.442695
      %v243 = vpow.pop %v242
      %v244 = vmul.f32 %v233, 1.442695
      %v245 = vpow.pop %v244
      %v246 = vmul.f32 %v234, 1.442695
      %v247 = vpow.pop %v246
      %v248 = vmul.f32 %v235, 1.442695
      %v249 = vpow.pop %v248
      %v250 = vmul.f32 %v236, 1.442695
      %v251 = vpow.pop %v250
      %v252 = vmul.f32 %v237, 1.442695
      %v253 = vpow.pop %v252
      %vm254 = vcmp.gt.f32.partialorder %v206, 0.0
      %vm255 = vcmp.gt.f32.partialorder %v207, 0.0
      %vm256 = vcmp.gt.f32.partialorder %v208, 0.0
      %vm257 = vcmp.gt.f32.partialorder %v209, 0.0
      %v258 = vadd.f32 %v239, 1.0
      %v259 = vadd.f32 %v241, 1.0
      %v260 = vadd.f32 %v243, 1.0
      %v261 = vadd.f32 %v245, 1.0
      %v262 = vadd.f32 %v247, 1.0
      %v263 = vadd.f32 %v249, 1.0
      %v264 = vadd.f32 %v251, 1.0
      %v265 = vadd.f32 %v253, 1.0
      %v266 = vrcp.pop %v258
      %v267 = vmul.f32 1.0, %v266
      %v268 = vrcp.pop %v259
      %v269 = vmul.f32 1.0, %v268
      %v270 = vrcp.pop %v260
      %v271 = vmul.f32 1.0, %v270
      %v272 = vrcp.pop %v261
      %v273 = vmul.f32 1.0, %v272
      %v274 = vrcp.pop %v262
      %v275 = vmul.f32 1.0, %v274
      %v276 = vrcp.pop %v263
      %v277 = vmul.f32 1.0, %v276
      %v278 = vrcp.pop %v264
      %v279 = vmul.f32 1.0, %v278
      %v280 = vrcp.pop %v265
      %v281 = vmul.f32 1.0, %v280
      %v282 = vsel %vm254, 1, 0
      %v283 = vsel %vm255, 1, 0
      %v284 = vsel %vm256, 1, 0
      %v285 = vsel %vm257, 1, 0
      %286 = vset.pattern.permute.xlu0 0
      %287 = vperm.xlu0 %286, %v282
      %v288 = vpop.permute.xlu0 %287
      %289 = vset.pattern.permute.xlu0 0
      %290 = vperm.xlu0 %289, %v283
      %v291 = vpop.permute.xlu0 %290
      %292 = vset.pattern.permute.xlu0 0
      %293 = vperm.xlu0 %292, %v284
      %v294 = vpop.permute.xlu0 %293
      %295 = vset.pattern.permute.xlu0 0
      %296 = vperm.xlu0 %295, %v285
      %v297 = vpop.permute.xlu0 %296
      %vm298 = vcmp.eq.s32.totalorder %v288, 1
      %vm299 = vcmp.eq.s32.totalorder %v291, 1
      %vm300 = vcmp.eq.s32.totalorder %v294, 1
      %vm301 = vcmp.eq.s32.totalorder %v297, 1
      %v302 = vsel %vm298, %v239, %v267
      %v303 = vsel %vm298, %v241, %v269
      %v304 = vsel %vm299, %v243, %v271
      %v305 = vsel %vm299, %v245, %v273
      %v306 = vsel %vm300, %v247, %v275
      %v307 = vsel %vm300, %v249, %v277
      %v308 = vsel %vm301, %v251, %v279
      %v309 = vsel %vm301, %v253, %v281
      %v310 = vld [vmem:[%s2] sm:$0xff]
      %v311 = vld [vmem:[%s2 + $0x8] sm:$0xff]
      %v312 = vld [vmem:[%s2 + $0x10] sm:$0xff]
      %v313 = vld [vmem:[%s2 + $0x18] sm:$0x7]
      %315 = vset.pattern.permute.xlu0 0
      %316 = vperm.xlu0 %315, %v310
      %v317 = vpop.permute.xlu0 %316
      %320 = vset.pattern.permute.xlu0 0
      %321 = vperm.xlu0 %320, %v311
      %v322 = vpop.permute.xlu0 %321
      %325 = vset.pattern.permute.xlu0 0
      %326 = vperm.xlu0 %325, %v312
      %v327 = vpop.permute.xlu0 %326
      %330 = vset.pattern.permute.xlu0 0
      %331 = vperm.xlu0 %330, %v313
      %v332 = vpop.permute.xlu0 %331
      %v334 = vmul.f32 %v302, %v317
      %v335 = vmul.f32 %v303, %v317
      %v336 = vmul.f32 %v304, %v322
      %v337 = vmul.f32 %v305, %v322
      %v338 = vmul.f32 %v306, %v327
      %v339 = vmul.f32 %v307, %v327
      %v340 = vmul.f32 %v308, %v332
      %v341 = vmul.f32 %v309, %v332
      %v342 = vld [vmem:[%s3] sm:$0xff]
      %v343 = vld [vmem:[%s3 + $0x8] sm:$0xff]
      %v344 = vld [vmem:[%s3 + $0x10] sm:$0xff]
      %v345 = vld [vmem:[%s3 + $0x18] sm:$0xff]
      %v346 = vld [vmem:[%s3 + $0x20] sm:$0xff]
      %v347 = vld [vmem:[%s3 + $0x28] sm:$0xff]
      %v348 = vld [vmem:[%s3 + $0x30] sm:$0x7]
      %v349 = vld [vmem:[%s3 + $0x38] sm:$0x7]
      %v350 = vadd.f32 %v334, %v342
      %v351 = vadd.f32 %v335, %v343
      %v352 = vadd.f32 %v336, %v344
      %v353 = vadd.f32 %v337, %v345
      %v354 = vadd.f32 %v338, %v346
      %v355 = vadd.f32 %v339, %v347
      %v356 = vadd.f32 %v340, %v348
      %v357 = vadd.f32 %v341, %v349
      %358 = vst [vmem:[%s197] sm:$0xff] %v350
      %359 = vst [vmem:[%s197 + $0x8] sm:$0xff] %v351
      %360 = vst [vmem:[%s197 + $0x10] sm:$0xff] %v352
      %361 = vst [vmem:[%s197 + $0x18] sm:$0xff] %v353
      %362 = vst [vmem:[%s197 + $0x20] sm:$0xff] %v354
      %363 = vst [vmem:[%s197 + $0x28] sm:$0xff] %v355
      %364 = vst [vmem:[%s197 + $0x30] sm:$0x7] %v356
      %365 = vst [vmem:[%s197 + $0x38] sm:$0x7] %v357
      %p366 = scmp.lt.s32.totalorder %s15, 1
      %s367 = scalar_select %p366, %s15, 1
      %s368 = smul.addr %s367, 8
      %s369 = smul.addr %s368, 8
      %s370 = scalar_lea.vmem %s4, %s369
      // Predicated region
      $region37: #{tpu_custom_call.1} parent=35 // pred_check
        %p371 = pneg %p122
      $region38: #{tpu_custom_call.1} parent=35 // pred_check_branch
        %373 = sbr.rel (%p371) target = $region40
      $region39: #{tpu_custom_call.1} parent=35 // pred_region
        _
      $region40: #{tpu_custom_call.1} parent=35 // pred_fallthru
        _
    $region36: #{tpu_custom_call.1} parent=5 // pred_fallthru
      _
    %p374 = scmp.le.s32.totalorder 2, %s10
    // Predicated region
    $region41: #{tpu_custom_call.1} parent=5 // pred_check
      %p375 = pneg %p374
    $region42: #{tpu_custom_call.1} parent=5 // pred_check_branch
      %377 = sbr.rel (%p375) target = $region44
    $region43: #{tpu_custom_call.1} parent=5 // pred_region
      %s378 = ssub.s32 %s10, 2
      // Predicated region
      $region45: #{tpu_custom_call.1} parent=43 // pred_check
        %p379 = pneg %p128
      $region46: #{tpu_custom_call.1} parent=43 // pred_check_branch
        %381 = sbr.rel (%p379) target = $region48
      $region47: #{tpu_custom_call.1} parent=43 // pred_region
        %p382 = scmp.lt.s32.totalorder %s16, 1
        %s383 = scalar_select %p382, %s16, 1
        %s384 = smul.addr %s383, 8
        %s385 = smul.addr %s384, 8
        %s386 = scalar_lea.vmem %s4, %s385
      $region48: #{tpu_custom_call.1} parent=43 // pred_fallthru
        _
    $region44: #{tpu_custom_call.1} parent=5 // pred_fallthru
      _
  $region6: #{tpu_custom_call.1} parent=0 // loop_footer
    %s14 = sadd.s32 1, %s10
  $region7: #{tpu_custom_call.1} parent=0 // loop_footer_branch
    %9 = sbr.rel target = $region3
  $region8: #{tpu_custom_call.1} parent=0 // loop_exit
    _

</llo_original>
